<compile_context>
chip_gen: v5e
topology: v5e:2x2
jax: 0.10.0
libtpu: 0.0.40
codegen_flags: <defaults>
</compile_context>

<pallas_src>
import math

import numpy as np
import jax
import jax.numpy as jnp
from jax import lax
from jax.experimental import pallas as pl
from jax.experimental.pallas import tpu as pltpu

EPS = 1e-5
INV_SQRT2 = 1.0 / math.sqrt(2.0)


def _gelu_exact(x):
    # nn.GELU() default (approximate='none') -> exact erf-based GELU.
    return 0.5 * x * (1.0 + lax.erf(x * INV_SQRT2))


def _block_kernel(x_ref, w1_ref, w2_ref, gb1_ref, gb2_ref,
                  o_ref, xpad_ref, hpad_ref):
    """One batch sample, both stages fused.

    x_ref:    (1, H, W*Cin)       channel-packed input (un-padded)
    w1_ref:   (3, W*Cin,  W*Cmid) per-ky block-expanded conv1 weights
    w2_ref:   (3, W*Cmid, W*Cout) per-ky block-expanded conv2 weights
    gb1_ref:  (2, W*Cmid)         GroupNorm1 [gamma; beta], tiled per pixel
    gb2_ref:  (2, W*Cout)         GroupNorm2 [gamma; beta], tiled per pixel
    o_ref:    (1, H, W*Cout)      channel-packed output (lane-dense)
    xpad_ref: (H+2, W*Cin)  VMEM scratch: row-zero-padded stage-1 input
    hpad_ref: (H+2, W*Cmid) VMEM scratch: row-zero-padded stage-1 output
    """
    H = x_ref.shape[1]

    def conv3x3(pad_ref, w_ref):
        # "same" 3x3 conv as 3 MXU matmuls (one per ky row tap).  Column
        # padding + kx taps + channel contraction are folded into the K axis
        # of the block-expanded weight:
        #   (H, W*Cin) @ (W*Cin, W*Cout) -> (H, W*Cout)
        acc = jnp.dot(pad_ref[0:H, :], w_ref[0],
                      preferred_element_type=jnp.float32)
        acc += jnp.dot(pad_ref[1:1 + H, :], w_ref[1],
                       preferred_element_type=jnp.float32)
        acc += jnp.dot(pad_ref[2:2 + H, :], w_ref[2],
                       preferred_element_type=jnp.float32)
        return acc

    def gelu_groupnorm(h, gb_ref):
        h = _gelu_exact(h)
        # GroupNorm(num_groups=1): normalize over all spatial+channel elems of
        # the sample (exactly the packed (H, W*C) block), biased variance.
        # Two-pass mean/var (numerically safe), single fused normalize pass.
        mean = jnp.mean(h)
        var = jnp.mean((h - mean) * (h - mean))
        scale = lax.rsqrt(var + EPS) * gb_ref[0:1, :]   # (1, W*C)
        shift = gb_ref[1:2, :] - mean * scale           # (1, W*C)
        return h * scale + shift

    # ------------- stage 1: conv(in->mid) + GELU + GroupNorm(1) -------------
    zin = jnp.zeros((1, xpad_ref.shape[1]), jnp.float32)
    xpad_ref[0:1, :] = zin                   # top halo row
    xpad_ref[H + 1:H + 2, :] = zin           # bottom halo row
    xpad_ref[1:1 + H, :] = x_ref[0]          # body rows
    h1 = gelu_groupnorm(conv3x3(xpad_ref, w1_ref), gb1_ref)

    # ------------- stage 2: conv(mid->out) + GELU + GroupNorm(1) ------------
    zmid = jnp.zeros((1, hpad_ref.shape[1]), jnp.float32)
    hpad_ref[0:1, :] = zmid
    hpad_ref[H + 1:H + 2, :] = zmid
    hpad_ref[1:1 + H, :] = h1                # intermediate stays in VMEM
    h2 = gelu_groupnorm(conv3x3(hpad_ref, w2_ref), gb2_ref)

    o_ref[...] = h2.reshape(o_ref.shape)


def _expand_conv_weight(w_oihw, W):
    """OIHW 3x3 weight -> (3, W*Cin, W*Cout) per-ky block-expanded weight.

    big[ky, xin*Cin + ci, x*Cout + co] = w[co, ci, ky, xin - x + 1]
        if 0 <= xin - x + 1 < 3 else 0
    so that sum_ky ( padded_row[y+ky] @ big[ky] ) equals the 3x3 same-conv
    (out-of-range columns simply drop out == zero padding).
    """
    Cout, Cin, KH, KW = w_oihw.shape
    w_hwio = jnp.transpose(w_oihw, (2, 3, 1, 0)).astype(jnp.float32)  # ky,kx,ci,co
    sel = np.zeros((W, KW, W), np.float32)        # sel[xin, kx, x]
    for x in range(W):
        for kx in range(KW):
            xin = x + kx - 1
            if 0 <= xin < W:
                sel[xin, kx, x] = 1.0
    big = jnp.einsum('akx,ykic->yaixc', sel, w_hwio)  # (KH, W, Cin, W, Cout)
    return big.reshape(KH, W * Cin, W * Cout)


def block_forward(x_nchw, params):
    """Full Block forward. x_nchw: (N, Cin, H, W) -> (N, Cout, H, W)."""
    w1, g1, b1, w2, g2, b2 = params
    N, Cin, H, W = x_nchw.shape
    Cmid, Cout = w1.shape[0], w2.shape[0]
    Hp = H + 2

    # NCHW -> channel-packed channels-last (N, H, W*Cin): channels on lanes.
    x_pk = jnp.transpose(x_nchw.astype(jnp.float32),
                         (0, 2, 3, 1)).reshape(N, H, W * Cin)

    w1_big = _expand_conv_weight(w1, W)    # (3, W*Cin,  W*Cmid)
    w2_big = _expand_conv_weight(w2, W)    # (3, W*Cmid, W*Cout)
    gb1_pk = jnp.stack([jnp.tile(g1.astype(jnp.float32), W),
                        jnp.tile(b1.astype(jnp.float32), W)])  # (2, W*Cmid)
    gb2_pk = jnp.stack([jnp.tile(g2.astype(jnp.float32), W),
                        jnp.tile(b2.astype(jnp.float32), W)])  # (2, W*Cout)

    out_pk = pl.pallas_call(
        _block_kernel,
        out_shape=jax.ShapeDtypeStruct((N, H, W * Cout), jnp.float32),
        grid_spec=pltpu.PrefetchScalarGridSpec(
            num_scalar_prefetch=0,
            grid=(N,),
            in_specs=[
                pl.BlockSpec((1, H, W * Cin), lambda n: (n, 0, 0)),
                pl.BlockSpec((3, W * Cin, W * Cmid), lambda n: (0, 0, 0)),
                pl.BlockSpec((3, W * Cmid, W * Cout), lambda n: (0, 0, 0)),
                pl.BlockSpec((2, W * Cmid), lambda n: (0, 0)),
                pl.BlockSpec((2, W * Cout), lambda n: (0, 0)),
            ],
            out_specs=pl.BlockSpec((1, H, W * Cout), lambda n: (n, 0, 0)),
            scratch_shapes=[
                pltpu.VMEM((Hp, W * Cin), jnp.float32),   # padded stage-1 input
                pltpu.VMEM((Hp, W * Cmid), jnp.float32),  # padded stage-1 output
            ],
        ),
        compiler_params=pltpu.CompilerParams(
            dimension_semantics=("parallel",)),
    )(x_pk, w1_big, w2_big, gb1_pk, gb2_pk)

    # (N, H, W*Cout) -> NCHW
    return jnp.transpose(out_pk.reshape(N, H, W, Cout), (0, 3, 1, 2))


# ---------------- pure-JAX reference (for verification only) ----------------
def _ref_stage(x_nchw, w_oihw, gamma, beta):
    y = lax.conv_general_dilated(
        x_nchw, w_oihw, window_strides=(1, 1), padding="SAME",
        dimension_numbers=("NCHW", "OIHW", "NCHW"))
    y = 0.5 * y * (1.0 + lax.erf(y * INV_SQRT2))
    mean = jnp.mean(y, axis=(1, 2, 3), keepdims=True)
    var = jnp.mean((y - mean) ** 2, axis=(1, 2, 3), keepdims=True)
    y = (y - mean) * lax.rsqrt(var + EPS)
    return y * gamma.reshape(1, -1, 1, 1) + beta.reshape(1, -1, 1, 1)


def block_forward_ref(x_nchw, params):
    w1, g1, b1, w2, g2, b2 = params
    h = _ref_stage(x_nchw, w1, g1, b1)
    return _ref_stage(h, w2, g2, b2)


if __name__ == "__main__":
    # Small shapes consistent with the module: N=2, in_ch=4, mid=out=8, 16x16.
    N, IN_CH, MID_CH, OUT_CH, H, W = 2, 4, 8, 8, 16, 16

    key = jax.random.PRNGKey(0)
    k1, k2, k3, k4, k5, k6, kx = jax.random.split(key, 7)

    # Deterministic synthetic parameters (PyTorch shapes: conv OIHW).
    w1 = 0.1 * jax.random.normal(k1, (MID_CH, IN_CH, 3, 3), jnp.float32)
    w2 = 0.1 * jax.random.normal(k2, (OUT_CH, MID_CH, 3, 3), jnp.float32)
    g1 = 1.0 + 0.05 * jax.random.normal(k3, (MID_CH,), jnp.float32)
    b1 = 0.05 * jax.random.normal(k4, (MID_CH,), jnp.float32)
    g2 = 1.0 + 0.05 * jax.random.normal(k5, (OUT_CH,), jnp.float32)
    b2 = 0.05 * jax.random.normal(k6, (OUT_CH,), jnp.float32)
    params = (w1, g1, b1, w2, g2, b2)

    x = jax.random.normal(kx, (N, IN_CH, H, W), jnp.float32)

    out = jax.block_until_ready(jax.jit(block_forward)(x, params))
    ref = jax.block_until_ready(block_forward_ref(x, params))

    assert out.shape == (N, OUT_CH, H, W)
    np.testing.assert_allclose(np.asarray(out), np.asarray(ref),
                               rtol=1e-4, atol=1e-4)

    print("KERNEL_OK")
</pallas_src>

<mosaic_0001>
module attributes {stable_mosaic.version = 11 : i64} {
  func.func @_block_kernel(%arg0: i32, %arg1: memref<1x16x64xf32, #tpu.memory_space<vmem>>, %arg2: memref<3x64x128xf32, #tpu.memory_space<vmem>>, %arg3: memref<3x128x128xf32, #tpu.memory_space<vmem>>, %arg4: memref<2x128xf32, #tpu.memory_space<vmem>>, %arg5: memref<2x128xf32, #tpu.memory_space<vmem>>, %arg6: memref<1x16x128xf32, #tpu.memory_space<vmem>>, %arg7: memref<18x64xf32, #tpu.memory_space<vmem>>, %arg8: memref<18x128xf32, #tpu.memory_space<vmem>>) attributes {dimension_semantics = [#tpu.dimension_semantics<parallel>], iteration_bounds = array<i64: 2>, scalar_prefetch = 0 : i64, scratch_operands = 2 : i64, tpu.core_type = #tpu.core_type<tc>, window_params = [{transform_indices = @transform_0, window_bounds = array<i64: 1, 16, 64>}, {pipeline_mode = #tpu.pipeline_mode<synchronous>, transform_indices = @transform_1, window_bounds = array<i64: 3, 64, 128>}, {pipeline_mode = #tpu.pipeline_mode<synchronous>, transform_indices = @transform_2, window_bounds = array<i64: 3, 128, 128>}, {pipeline_mode = #tpu.pipeline_mode<synchronous>, transform_indices = @transform_3, window_bounds = array<i64: 2, 128>}, {pipeline_mode = #tpu.pipeline_mode<synchronous>, transform_indices = @transform_4, window_bounds = array<i64: 2, 128>}, {transform_indices = @transform_5, window_bounds = array<i64: 1, 16, 128>}]} {
    %cst = arith.constant 0.000000e+00 : f32
    %0 = vector.broadcast %cst : f32 to vector<1x64xf32>
    %c0 = arith.constant 0 : index
    %c0_0 = arith.constant 0 : index
    %1 = vector.load %arg7[%c0, %c0_0] : memref<18x64xf32, #tpu.memory_space<vmem>>, vector<1x64xf32>
    tpu.vector_store %arg7[%c0, %c0_0], %0 {strides = array<i32>} : memref<18x64xf32, #tpu.memory_space<vmem>>, vector<1x64xf32>,
    %c17 = arith.constant 17 : index
    %c0_1 = arith.constant 0 : index
    %2 = vector.load %arg7[%c17, %c0_1] : memref<18x64xf32, #tpu.memory_space<vmem>>, vector<1x64xf32>
    tpu.vector_store %arg7[%c17, %c0_1], %0 {strides = array<i32>} : memref<18x64xf32, #tpu.memory_space<vmem>>, vector<1x64xf32>,
    %c0_2 = arith.constant 0 : index
    %c0_3 = arith.constant 0 : index
    %c0_4 = arith.constant 0 : index
    %3 = vector.load %arg1[%c0_2, %c0_3, %c0_4] : memref<1x16x64xf32, #tpu.memory_space<vmem>>, vector<1x16x64xf32>
    %4 = vector.shape_cast %3 : vector<1x16x64xf32> to vector<16x64xf32>
    %c1 = arith.constant 1 : index
    %c0_5 = arith.constant 0 : index
    %5 = vector.load %arg7[%c1, %c0_5] : memref<18x64xf32, #tpu.memory_space<vmem>>, vector<16x64xf32>
    tpu.vector_store %arg7[%c1, %c0_5], %4 {strides = array<i32>} : memref<18x64xf32, #tpu.memory_space<vmem>>, vector<16x64xf32>,
    %c0_6 = arith.constant 0 : index
    %c0_7 = arith.constant 0 : index
    %6 = vector.load %arg7[%c0_6, %c0_7] : memref<18x64xf32, #tpu.memory_space<vmem>>, vector<16x64xf32>
    %c0_8 = arith.constant 0 : index
    %c0_9 = arith.constant 0 : index
    %c0_10 = arith.constant 0 : index
    %7 = vector.load %arg2[%c0_8, %c0_9, %c0_10] : memref<3x64x128xf32, #tpu.memory_space<vmem>>, vector<1x64x128xf32>
    %8 = vector.shape_cast %7 : vector<1x64x128xf32> to vector<64x128xf32>
    %cst_11 = arith.constant dense<0.000000e+00> : vector<16x128xf32>
    %9 = tpu.matmul %6, %8, %cst_11 {dimension_numbers = #tpu.dot_dimension_numbers<[1], [0], [0], [1], [0, 0, 1, 1], [], []>} : vector<16x64xf32>, vector<64x128xf32>, vector<16x128xf32> -> vector<16x128xf32>
    %c1_12 = arith.constant 1 : index
    %c0_13 = arith.constant 0 : index
    %10 = vector.load %arg7[%c1_12, %c0_13] : memref<18x64xf32, #tpu.memory_space<vmem>>, vector<16x64xf32>
    %c1_14 = arith.constant 1 : index
    %c0_15 = arith.constant 0 : index
    %c0_16 = arith.constant 0 : index
    %11 = vector.load %arg2[%c1_14, %c0_15, %c0_16] : memref<3x64x128xf32, #tpu.memory_space<vmem>>, vector<1x64x128xf32>
    %12 = vector.shape_cast %11 : vector<1x64x128xf32> to vector<64x128xf32>
    %cst_17 = arith.constant dense<0.000000e+00> : vector<16x128xf32>
    %13 = tpu.matmul %10, %12, %cst_17 {dimension_numbers = #tpu.dot_dimension_numbers<[1], [0], [0], [1], [0, 0, 1, 1], [], []>} : vector<16x64xf32>, vector<64x128xf32>, vector<16x128xf32> -> vector<16x128xf32>
    %14 = arith.addf %9, %13 : vector<16x128xf32>
    %c2 = arith.constant 2 : index
    %c0_18 = arith.constant 0 : index
    %15 = vector.load %arg7[%c2, %c0_18] : memref<18x64xf32, #tpu.memory_space<vmem>>, vector<16x64xf32>
    %c2_19 = arith.constant 2 : index
    %c0_20 = arith.constant 0 : index
    %c0_21 = arith.constant 0 : index
    %16 = vector.load %arg2[%c2_19, %c0_20, %c0_21] : memref<3x64x128xf32, #tpu.memory_space<vmem>>, vector<1x64x128xf32>
    %17 = vector.shape_cast %16 : vector<1x64x128xf32> to vector<64x128xf32>
    %cst_22 = arith.constant dense<0.000000e+00> : vector<16x128xf32>
    %18 = tpu.matmul %15, %17, %cst_22 {dimension_numbers = #tpu.dot_dimension_numbers<[1], [0], [0], [1], [0, 0, 1, 1], [], []>} : vector<16x64xf32>, vector<64x128xf32>, vector<16x128xf32> -> vector<16x128xf32>
    %19 = arith.addf %14, %18 : vector<16x128xf32>
    %cst_23 = arith.constant 5.000000e-01 : f32
    %20 = vector.broadcast %cst_23 : f32 to vector<16x128xf32>
    %21 = arith.mulf %20, %19 : vector<16x128xf32>
    %cst_24 = arith.constant 0.707106769 : f32
    %22 = vector.broadcast %cst_24 : f32 to vector<16x128xf32>
    %23 = arith.mulf %19, %22 : vector<16x128xf32>
    %24 = math.erf %23 : vector<16x128xf32>
    %cst_25 = arith.constant 1.000000e+00 : f32
    %25 = vector.broadcast %cst_25 : f32 to vector<16x128xf32>
    %26 = arith.addf %25, %24 : vector<16x128xf32>
    %27 = arith.mulf %21, %26 : vector<16x128xf32>
    %28 = vector.shape_cast %27 : vector<16x128xf32> to vector<1x16x128xf32>
    %cst_26 = arith.constant dense<0.000000e+00> : vector<1xf32>
    %29 = vector.multi_reduction <add>, %28, %cst_26 [1, 2] : vector<1x16x128xf32> to vector<1xf32>
    %30 = vector.shape_cast %29 : vector<1xf32> to vector<1x1x1xf32>
    %31 = vector.extract %30[0, 0, 0] : f32 from vector<1x1x1xf32>
    %cst_27 = arith.constant 2.048000e+03 : f32
    %32 = arith.divf %31, %cst_27 : f32
    %33 = vector.broadcast %32 : f32 to vector<16x128xf32>
    %34 = arith.subf %27, %33 : vector<16x128xf32>
    %35 = vector.broadcast %32 : f32 to vector<16x128xf32>
    %36 = arith.subf %27, %35 : vector<16x128xf32>
    %37 = arith.mulf %34, %36 : vector<16x128xf32>
    %38 = vector.shape_cast %37 : vector<16x128xf32> to vector<1x16x128xf32>
    %cst_28 = arith.constant dense<0.000000e+00> : vector<1xf32>
    %39 = vector.multi_reduction <add>, %38, %cst_28 [1, 2] : vector<1x16x128xf32> to vector<1xf32>
    %40 = vector.shape_cast %39 : vector<1xf32> to vector<1x1x1xf32>
    %41 = vector.extract %40[0, 0, 0] : f32 from vector<1x1x1xf32>
    %cst_29 = arith.constant 2.048000e+03 : f32
    %42 = arith.divf %41, %cst_29 : f32
    %cst_30 = arith.constant 9.99999974E-6 : f32
    %43 = arith.addf %42, %cst_30 : f32
    %44 = math.rsqrt %43 : f32
    %c0_31 = arith.constant 0 : index
    %c0_32 = arith.constant 0 : index
    %45 = vector.load %arg4[%c0_31, %c0_32] : memref<2x128xf32, #tpu.memory_space<vmem>>, vector<1x128xf32>
    %46 = vector.broadcast %44 : f32 to vector<1x128xf32>
    %47 = arith.mulf %46, %45 : vector<1x128xf32>
    %c1_33 = arith.constant 1 : index
    %c0_34 = arith.constant 0 : index
    %48 = vector.load %arg4[%c1_33, %c0_34] : memref<2x128xf32, #tpu.memory_space<vmem>>, vector<1x128xf32>
    %49 = vector.broadcast %32 : f32 to vector<1x128xf32>
    %50 = arith.mulf %49, %47 : vector<1x128xf32>
    %51 = arith.subf %48, %50 : vector<1x128xf32>
    %52 = vector.broadcast %47 : vector<1x128xf32> to vector<16x128xf32>
    %53 = arith.mulf %27, %52 : vector<16x128xf32>
    %54 = vector.broadcast %51 : vector<1x128xf32> to vector<16x128xf32>
    %55 = arith.addf %53, %54 : vector<16x128xf32>
    %cst_35 = arith.constant 0.000000e+00 : f32
    %56 = vector.broadcast %cst_35 : f32 to vector<1x128xf32>
    %c0_36 = arith.constant 0 : index
    %c0_37 = arith.constant 0 : index
    %57 = vector.load %arg8[%c0_36, %c0_37] : memref<18x128xf32, #tpu.memory_space<vmem>>, vector<1x128xf32>
    tpu.vector_store %arg8[%c0_36, %c0_37], %56 {strides = array<i32>} : memref<18x128xf32, #tpu.memory_space<vmem>>, vector<1x128xf32>,
    %c17_38 = arith.constant 17 : index
    %c0_39 = arith.constant 0 : index
    %58 = vector.load %arg8[%c17_38, %c0_39] : memref<18x128xf32, #tpu.memory_space<vmem>>, vector<1x128xf32>
    tpu.vector_store %arg8[%c17_38, %c0_39], %56 {strides = array<i32>} : memref<18x128xf32, #tpu.memory_space<vmem>>, vector<1x128xf32>,
    %c1_40 = arith.constant 1 : index
    %c0_41 = arith.constant 0 : index
    %59 = vector.load %arg8[%c1_40, %c0_41] : memref<18x128xf32, #tpu.memory_space<vmem>>, vector<16x128xf32>
    tpu.vector_store %arg8[%c1_40, %c0_41], %55 {strides = array<i32>} : memref<18x128xf32, #tpu.memory_space<vmem>>, vector<16x128xf32>,
    %c0_42 = arith.constant 0 : index
    %c0_43 = arith.constant 0 : index
    %60 = vector.load %arg8[%c0_42, %c0_43] : memref<18x128xf32, #tpu.memory_space<vmem>>, vector<16x128xf32>
    %c0_44 = arith.constant 0 : index
    %c0_45 = arith.constant 0 : index
    %c0_46 = arith.constant 0 : index
    %61 = vector.load %arg3[%c0_44, %c0_45, %c0_46] : memref<3x128x128xf32, #tpu.memory_space<vmem>>, vector<1x128x128xf32>
    %62 = vector.shape_cast %61 : vector<1x128x128xf32> to vector<128x128xf32>
    %cst_47 = arith.constant dense<0.000000e+00> : vector<16x128xf32>
    %63 = tpu.matmul %60, %62, %cst_47 {dimension_numbers = #tpu.dot_dimension_numbers<[1], [0], [0], [1], [0, 0, 1, 1], [], []>} : vector<16x128xf32>, vector<128x128xf32>, vector<16x128xf32> -> vector<16x128xf32>
    %c1_48 = arith.constant 1 : index
    %c0_49 = arith.constant 0 : index
    %64 = vector.load %arg8[%c1_48, %c0_49] : memref<18x128xf32, #tpu.memory_space<vmem>>, vector<16x128xf32>
    %c1_50 = arith.constant 1 : index
    %c0_51 = arith.constant 0 : index
    %c0_52 = arith.constant 0 : index
    %65 = vector.load %arg3[%c1_50, %c0_51, %c0_52] : memref<3x128x128xf32, #tpu.memory_space<vmem>>, vector<1x128x128xf32>
    %66 = vector.shape_cast %65 : vector<1x128x128xf32> to vector<128x128xf32>
    %cst_53 = arith.constant dense<0.000000e+00> : vector<16x128xf32>
    %67 = tpu.matmul %64, %66, %cst_53 {dimension_numbers = #tpu.dot_dimension_numbers<[1], [0], [0], [1], [0, 0, 1, 1], [], []>} : vector<16x128xf32>, vector<128x128xf32>, vector<16x128xf32> -> vector<16x128xf32>
    %68 = arith.addf %63, %67 : vector<16x128xf32>
    %c2_54 = arith.constant 2 : index
    %c0_55 = arith.constant 0 : index
    %69 = vector.load %arg8[%c2_54, %c0_55] : memref<18x128xf32, #tpu.memory_space<vmem>>, vector<16x128xf32>
    %c2_56 = arith.constant 2 : index
    %c0_57 = arith.constant 0 : index
    %c0_58 = arith.constant 0 : index
    %70 = vector.load %arg3[%c2_56, %c0_57, %c0_58] : memref<3x128x128xf32, #tpu.memory_space<vmem>>, vector<1x128x128xf32>
    %71 = vector.shape_cast %70 : vector<1x128x128xf32> to vector<128x128xf32>
    %cst_59 = arith.constant dense<0.000000e+00> : vector<16x128xf32>
    %72 = tpu.matmul %69, %71, %cst_59 {dimension_numbers = #tpu.dot_dimension_numbers<[1], [0], [0], [1], [0, 0, 1, 1], [], []>} : vector<16x128xf32>, vector<128x128xf32>, vector<16x128xf32> -> vector<16x128xf32>
    %73 = arith.addf %68, %72 : vector<16x128xf32>
    %cst_60 = arith.constant 5.000000e-01 : f32
    %74 = vector.broadcast %cst_60 : f32 to vector<16x128xf32>
    %75 = arith.mulf %74, %73 : vector<16x128xf32>
    %cst_61 = arith.constant 0.707106769 : f32
    %76 = vector.broadcast %cst_61 : f32 to vector<16x128xf32>
    %77 = arith.mulf %73, %76 : vector<16x128xf32>
    %78 = math.erf %77 : vector<16x128xf32>
    %cst_62 = arith.constant 1.000000e+00 : f32
    %79 = vector.broadcast %cst_62 : f32 to vector<16x128xf32>
    %80 = arith.addf %79, %78 : vector<16x128xf32>
    %81 = arith.mulf %75, %80 : vector<16x128xf32>
    %82 = vector.shape_cast %81 : vector<16x128xf32> to vector<1x16x128xf32>
    %cst_63 = arith.constant dense<0.000000e+00> : vector<1xf32>
    %83 = vector.multi_reduction <add>, %82, %cst_63 [1, 2] : vector<1x16x128xf32> to vector<1xf32>
    %84 = vector.shape_cast %83 : vector<1xf32> to vector<1x1x1xf32>
    %85 = vector.extract %84[0, 0, 0] : f32 from vector<1x1x1xf32>
    %cst_64 = arith.constant 2.048000e+03 : f32
    %86 = arith.divf %85, %cst_64 : f32
    %87 = vector.broadcast %86 : f32 to vector<16x128xf32>
    %88 = arith.subf %81, %87 : vector<16x128xf32>
    %89 = vector.broadcast %86 : f32 to vector<16x128xf32>
    %90 = arith.subf %81, %89 : vector<16x128xf32>
    %91 = arith.mulf %88, %90 : vector<16x128xf32>
    %92 = vector.shape_cast %91 : vector<16x128xf32> to vector<1x16x128xf32>
    %cst_65 = arith.constant dense<0.000000e+00> : vector<1xf32>
    %93 = vector.multi_reduction <add>, %92, %cst_65 [1, 2] : vector<1x16x128xf32> to vector<1xf32>
    %94 = vector.shape_cast %93 : vector<1xf32> to vector<1x1x1xf32>
    %95 = vector.extract %94[0, 0, 0] : f32 from vector<1x1x1xf32>
    %cst_66 = arith.constant 2.048000e+03 : f32
    %96 = arith.divf %95, %cst_66 : f32
    %cst_67 = arith.constant 9.99999974E-6 : f32
    %97 = arith.addf %96, %cst_67 : f32
    %98 = math.rsqrt %97 : f32
    %c0_68 = arith.constant 0 : index
    %c0_69 = arith.constant 0 : index
    %99 = vector.load %arg5[%c0_68, %c0_69] : memref<2x128xf32, #tpu.memory_space<vmem>>, vector<1x128xf32>
    %100 = vector.broadcast %98 : f32 to vector<1x128xf32>
    %101 = arith.mulf %100, %99 : vector<1x128xf32>
    %c1_70 = arith.constant 1 : index
    %c0_71 = arith.constant 0 : index
    %102 = vector.load %arg5[%c1_70, %c0_71] : memref<2x128xf32, #tpu.memory_space<vmem>>, vector<1x128xf32>
    %103 = vector.broadcast %86 : f32 to vector<1x128xf32>
    %104 = arith.mulf %103, %101 : vector<1x128xf32>
    %105 = arith.subf %102, %104 : vector<1x128xf32>
    %106 = vector.broadcast %101 : vector<1x128xf32> to vector<16x128xf32>
    %107 = arith.mulf %81, %106 : vector<16x128xf32>
    %108 = vector.broadcast %105 : vector<1x128xf32> to vector<16x128xf32>
    %109 = arith.addf %107, %108 : vector<16x128xf32>
    %110 = vector.shape_cast %109 : vector<16x128xf32> to vector<1x16x128xf32>
    %c0_72 = arith.constant 0 : index
    %c0_73 = arith.constant 0 : index
    %c0_74 = arith.constant 0 : index
    %111 = vector.load %arg6[%c0_72, %c0_73, %c0_74] : memref<1x16x128xf32, #tpu.memory_space<vmem>>, vector<1x16x128xf32>
    tpu.vector_store %arg6[%c0_72, %c0_73, %c0_74], %110 {strides = array<i32>} : memref<1x16x128xf32, #tpu.memory_space<vmem>>, vector<1x16x128xf32>,
    return
  }
  func.func @transform_0(%arg0: i32) -> (i32, i32, i32) {
    %c0_i32 = arith.constant 0 : i32
    %c0_i32_0 = arith.constant 0 : i32
    %c0_i32_1 = arith.constant 0 : i32
    return %arg0, %c0_i32, %c0_i32_0 : i32, i32, i32
  }
  func.func @transform_1(%arg0: i32) -> (i32, i32, i32) {
    %c0_i32 = arith.constant 0 : i32
    %c0_i32_0 = arith.constant 0 : i32
    %c0_i32_1 = arith.constant 0 : i32
    %c0_i32_2 = arith.constant 0 : i32
    return %c0_i32, %c0_i32_0, %c0_i32_1 : i32, i32, i32
  }
  func.func @transform_2(%arg0: i32) -> (i32, i32, i32) {
    %c0_i32 = arith.constant 0 : i32
    %c0_i32_0 = arith.constant 0 : i32
    %c0_i32_1 = arith.constant 0 : i32
    %c0_i32_2 = arith.constant 0 : i32
    return %c0_i32, %c0_i32_0, %c0_i32_1 : i32, i32, i32
  }
  func.func @transform_3(%arg0: i32) -> (i32, i32) {
    %c0_i32 = arith.constant 0 : i32
    %c0_i32_0 = arith.constant 0 : i32
    %c0_i32_1 = arith.constant 0 : i32
    return %c0_i32, %c0_i32_0 : i32, i32
  }
  func.func @transform_4(%arg0: i32) -> (i32, i32) {
    %c0_i32 = arith.constant 0 : i32
    %c0_i32_0 = arith.constant 0 : i32
    %c0_i32_1 = arith.constant 0 : i32
    return %c0_i32, %c0_i32_0 : i32, i32
  }
  func.func @transform_5(%arg0: i32) -> (i32, i32, i32) {
    %c0_i32 = arith.constant 0 : i32
    %c0_i32_0 = arith.constant 0 : i32
    %c0_i32_1 = arith.constant 0 : i32
    return %arg0, %c0_i32, %c0_i32_0 : i32, i32, i32
  }
}

</mosaic_0001>

<llo_original>
// kernel: tile.23
$region0: #{tile.23}
  #allocation0 [shape = 's32[1]{0}', space=sflag, size = 0x4, scoped, tag = 'scoped memory for tile.23']
  %s0 = inlined_call_operand.vmem [shape: f32[8], index: 0, kind: input, shape index: {}]
  %s1 = inlined_call_operand.vmem [shape: f32[16,8], index: 1, kind: output, shape index: {}]
  // Predicated region
  $region2: #{tile.23} parent=0 // pred_check
    _
  $region3: #{tile.23} parent=0 // pred_check_branch
    %3 = sbr.rel (0) target = $region5
  $region4: #{tile.23} parent=0 // pred_region
    _
  $region5: #{tile.23} parent=0 // pred_fallthru
    _
  %v4 = vld [vmem:[%s0] ss:$0 sm:$0xff]
  %5 = vst [vmem:[%s1] sm:$0xff] %v4
  %s6 = scalar_lea.vmem %s1, 8
  %7 = vst [vmem:[%s6] sm:$0xff] %v4

// kernel: tile.28
$region0: #{tile.28}
  %s0 = inlined_call_operand.vmem [shape: f32[16,8], index: 0, kind: input, shape index: {}]
  %s1 = inlined_call_operand.vmem [shape: f32[1,128], index: 1, kind: output, shape index: {}]
  $region1: #{tile.28} parent=0
    #allocation0 [shape = 'u8[4096]{0}', space=vmem, size = 0x1000, scoped, tag = 'scoped mem for output reshape']
    %v2 = vld [vmem:[%s0] sm:$0x1]
    %vm3 = vcmask 64512
    %4 = vst.msk [vmem:[#allocation0] sm:$0x1] %vm3, %v2
    %s5 = scalar_lea.vmem %s0, 15
    %v6 = vld [vmem:[%s5] sm:$0x1]
    %7 = vrot.lane.b32.xlu0 %v6, 120
    %v8 = vpop.permute.xlu0 %7
    %vm9 = vcmask 1048512
    %10 = vst.msk [vmem:[#allocation0] sm:$0x1] %vm9, %v8
    %s11 = scalar_lea.vmem %s0, 14
    %v12 = vld [vmem:[%s11] sm:$0x1]
    %13 = vrot.lane.b32.xlu0 %v12, 112
    %v14 = vpop.permute.xlu0 %13
    %vm15 = vcmask 982912
    %16 = vst.msk [vmem:[#allocation0] sm:$0x1] %vm15, %v14
    %s17 = scalar_lea.vmem %s0, 13
    %v18 = vld [vmem:[%s17] sm:$0x1]
    %19 = vrot.lane.b32.xlu0 %v18, 104
    %v20 = vpop.permute.xlu0 %19
    %vm21 = vcmask 917312
    %22 = vst.msk [vmem:[#allocation0] sm:$0x1] %vm21, %v20
    %s23 = scalar_lea.vmem %s0, 12
    %v24 = vld [vmem:[%s23] sm:$0x1]
    %25 = vrot.lane.b32.xlu0 %v24, 96
    %v26 = vpop.permute.xlu0 %25
    %vm27 = vcmask 851712
    %28 = vst.msk [vmem:[#allocation0] sm:$0x1] %vm27, %v26
    %s29 = scalar_lea.vmem %s0, 11
    %v30 = vld [vmem:[%s29] sm:$0x1]
    %31 = vrot.lane.b32.xlu0 %v30, 88
    %v32 = vpop.permute.xlu0 %31
    %vm33 = vcmask 786112
    %34 = vst.msk [vmem:[#allocation0] sm:$0x1] %vm33, %v32
    %s35 = scalar_lea.vmem %s0, 10
    %v36 = vld [vmem:[%s35] sm:$0x1]
    %37 = vrot.lane.b32.xlu0 %v36, 80
    %v38 = vpop.permute.xlu0 %37
    %vm39 = vcmask 720512
    %40 = vst.msk [vmem:[#allocation0] sm:$0x1] %vm39, %v38
    %s41 = scalar_lea.vmem %s0, 9
    %v42 = vld [vmem:[%s41] sm:$0x1]
    %43 = vrot.lane.b32.xlu0 %v42, 72
    %v44 = vpop.permute.xlu0 %43
    %vm45 = vcmask 654912
    %46 = vst.msk [vmem:[#allocation0] sm:$0x1] %vm45, %v44
    %s47 = scalar_lea.vmem %s0, 8
    %v48 = vld [vmem:[%s47] sm:$0x1]
    %49 = vrot.lane.b32.xlu0 %v48, 64
    %v50 = vpop.permute.xlu0 %49
    %vm51 = vcmask 589312
    %52 = vst.msk [vmem:[#allocation0] sm:$0x1] %vm51, %v50
    %s53 = scalar_lea.vmem %s0, 7
    %v54 = vld [vmem:[%s53] sm:$0x1]
    %55 = vrot.lane.b32.xlu0 %v54, 56
    %v56 = vpop.permute.xlu0 %55
    %vm57 = vcmask 523712
    %58 = vst.msk [vmem:[#allocation0] sm:$0x1] %vm57, %v56
    %s59 = scalar_lea.vmem %s0, 6
    %v60 = vld [vmem:[%s59] sm:$0x1]
    %61 = vrot.lane.b32.xlu0 %v60, 48
    %v62 = vpop.permute.xlu0 %61
    %vm63 = vcmask 458112
    %64 = vst.msk [vmem:[#allocation0] sm:$0x1] %vm63, %v62
    %s65 = scalar_lea.vmem %s0, 5
    %v66 = vld [vmem:[%s65] sm:$0x1]
    %67 = vrot.lane.b32.xlu0 %v66, 40
    %v68 = vpop.permute.xlu0 %67
    %vm69 = vcmask 392512
    %70 = vst.msk [vmem:[#allocation0] sm:$0x1] %vm69, %v68
    %s71 = scalar_lea.vmem %s0, 4
    %v72 = vld [vmem:[%s71] sm:$0x1]
    %73 = vrot.lane.b32.xlu0 %v72, 32
    %v74 = vpop.permute.xlu0 %73
    %vm75 = vcmask 326912
    %76 = vst.msk [vmem:[#allocation0] sm:$0x1] %vm75, %v74
    %s77 = scalar_lea.vmem %s0, 3
    %v78 = vld [vmem:[%s77] sm:$0x1]
    %79 = vrot.lane.b32.xlu0 %v78, 24
    %v80 = vpop.permute.xlu0 %79
    %vm81 = vcmask 261312
    %82 = vst.msk [vmem:[#allocation0] sm:$0x1] %vm81, %v80
    %s83 = scalar_lea.vmem %s0, 2
    %v84 = vld [vmem:[%s83] sm:$0x1]
    %85 = vrot.lane.b32.xlu0 %v84, 16
    %v86 = vpop.permute.xlu0 %85
    %vm87 = vcmask 195712
    %88 = vst.msk [vmem:[#allocation0] sm:$0x1] %vm87, %v86
    %s89 = scalar_lea.vmem %s0, 1
    %v90 = vld [vmem:[%s89] sm:$0x1]
    %91 = vrot.lane.b32.xlu0 %v90, 8
    %v92 = vpop.permute.xlu0 %91
    %vm93 = vcmask 130112
    %94 = vst.msk [vmem:[#allocation0] sm:$0x1] %vm93, %v92
    %s96 = ssub.s32 2, 1
    %v97 = vld [vmem:[#allocation0] sm:%s96]
    %s99 = ssub.s32 2, 1
    %100 = vst [vmem:[%s1] sm:%s99] %v97

// kernel: block_forward.1
$region0: #{block_forward.1}
  #allocation0 [shape = 'u32[]', space=smem, size = 0x4, offset = 0x4, fixed_abs, tag = 'smem constant byte address 0x4 - core index']
  #allocation1 [shape = 'u32[72,128]{1,0:T(1,128)}', space=vmem, size = 0x9000, scoped, tag = 'internal scratch']
  #allocation2 [shape = 'f32[18,64]{1,0:T(8,128)}', space=vmem, size = 0x3000, scoped, tag = 'scratch operand']
  #allocation3 [shape = 'f32[18,128]{1,0:T(8,128)}', space=vmem, size = 0x3000, scoped, tag = 'scratch operand']
  %s0 = inlined_call_operand.vmem [shape: f32[2,16,64], index: 0, kind: input, shape index: {}]
  %s1 = inlined_call_operand.vmem [shape: f32[3,64,128], index: 1, kind: input, shape index: {}]
  %s2 = inlined_call_operand.vmem [shape: f32[3,128,128], index: 2, kind: input, shape index: {}]
  %s3 = inlined_call_operand.vmem [shape: f32[2,128], index: 3, kind: input, shape index: {}]
  %s4 = inlined_call_operand.vmem [shape: f32[2,128], index: 4, kind: input, shape index: {}]
  %s5 = inlined_call_operand.vmem [shape: f32[2,16,128], index: 5, kind: output, shape index: {}]
  %s6 = sld [smem:[#allocation0]]
  $region53: #{block_forward.1} parent=0
    _
  %s8 = ssub.s32 1, %s6
  %s9 = scalar_select 0, %s8, %s6
  loop: start=0, step=1, limit=4
  $region2: #{block_forward.1} parent=0 // loop_pre_header
    _
  $region3: #{block_forward.1} parent=0 // loop_header
    %s11 = sphi 0, %s15
    %p12 = scmp.ge.s32.totalorder %s11, 4
    %s21 = sphi 0, %s23
    %s24 = sphi 0, %s21
    %s25 = sphi 0, %s24
    %s41 = sphi 0, %s25
    %s45 = sphi 0, %s45
    %s47 = sphi 0, %s45
    %s48 = sphi 0, %s47
    %s62 = sphi 0, %s48
    %s66 = sphi 0, %s66
    %s68 = sphi 0, %s66
    %s69 = sphi 0, %s68
    %s83 = sphi 0, %s69
    %s87 = sphi 0, %s87
    %s89 = sphi 0, %s87
    %s90 = sphi 0, %s89
    %s104 = sphi 0, %s90
    %s108 = sphi 0, %s108
    %s110 = sphi 0, %s108
    %s111 = sphi 0, %s110
    %s125 = sphi 0, %s111
    %s131 = sphi 0, %s133
    %s134 = sphi 0, %s131
    %s135 = sphi 0, %s134
    %s151 = sphi 0, %s135
  $region4: #{block_forward.1} parent=0 // loop_header_branch
    %14 = sbr.rel (%p12) target = $region8
  $region5: #{block_forward.1} parent=0 // loop_body
    %s16 = ssub.s32 %s11, 1
    %s17 = ssub.s32 %s11, 2
    %s18 = sadd.s32 %s11, 1
    %s19 = ssub.s32 %s11, %s18
    %p20 = scmp.eq.s32.totalorder %s19, 0
    %s22 = sadd.s32 %s21, 1
    %s23 = scalar_select %p20, %s21, %s22
    %p26 = pneg %p20
    %p27 = scmp.eq.s32.totalorder %s11, 1
    %p28 = por %p26, %p27
    %p29 = scmp.ne.s32.totalorder %s21, %s24
    %p30 = scmp.eq.s32.totalorder %s11, 0
    %p31 = por %p29, %p30
    %p32 = scmp.ne.s32.totalorder %s21, %s24
    %p33 = scmp.eq.s32.totalorder %s16, 1
    %p34 = por %p32, %p33
    %p35 = scmp.ne.s32.totalorder %s24, %s25
    %p36 = scmp.eq.s32.totalorder %s16, 0
    %p37 = por %p35, %p36
    %p38 = scmp.ne.s32.totalorder %s24, %s25
    %p39 = scmp.eq.s32.totalorder %s17, 1
    %p40 = por %p38, %p39
    %p42 = scmp.ne.s32.totalorder %s25, %s41
    %p43 = scmp.eq.s32.totalorder %s17, 0
    %p44 = por %p42, %p43
    %s46 = sadd.s32 %s45, 1
    %p49 = scmp.eq.s32.totalorder %s11, 1
    %p50 = scmp.ne.s32.totalorder %s45, %s47
    %p51 = scmp.eq.s32.totalorder %s11, 0
    %p52 = por %p50, %p51
    %p53 = scmp.ne.s32.totalorder %s45, %s47
    %p54 = scmp.eq.s32.totalorder %s16, 1
    %p55 = por %p53, %p54
    %p56 = scmp.ne.s32.totalorder %s47, %s48
    %p57 = scmp.eq.s32.totalorder %s16, 0
    %p58 = por %p56, %p57
    %p59 = scmp.ne.s32.totalorder %s47, %s48
    %p60 = scmp.eq.s32.totalorder %s17, 1
    %p61 = por %p59, %p60
    %p63 = scmp.ne.s32.totalorder %s48, %s62
    %p64 = scmp.eq.s32.totalorder %s17, 0
    %p65 = por %p63, %p64
    %s67 = sadd.s32 %s66, 1
    %p70 = scmp.eq.s32.totalorder %s11, 1
    %p71 = scmp.ne.s32.totalorder %s66, %s68
    %p72 = scmp.eq.s32.totalorder %s11, 0
    %p73 = por %p71, %p72
    %p74 = scmp.ne.s32.totalorder %s66, %s68
    %p75 = scmp.eq.s32.totalorder %s16, 1
    %p76 = por %p74, %p75
    %p77 = scmp.ne.s32.totalorder %s68, %s69
    %p78 = scmp.eq.s32.totalorder %s16, 0
    %p79 = por %p77, %p78
    %p80 = scmp.ne.s32.totalorder %s68, %s69
    %p81 = scmp.eq.s32.totalorder %s17, 1
    %p82 = por %p80, %p81
    %p84 = scmp.ne.s32.totalorder %s69, %s83
    %p85 = scmp.eq.s32.totalorder %s17, 0
    %p86 = por %p84, %p85
    %s88 = sadd.s32 %s87, 1
    %p91 = scmp.eq.s32.totalorder %s11, 1
    %p92 = scmp.ne.s32.totalorder %s87, %s89
    %p93 = scmp.eq.s32.totalorder %s11, 0
    %p94 = por %p92, %p93
    %p95 = scmp.ne.s32.totalorder %s87, %s89
    %p96 = scmp.eq.s32.totalorder %s16, 1
    %p97 = por %p95, %p96
    %p98 = scmp.ne.s32.totalorder %s89, %s90
    %p99 = scmp.eq.s32.totalorder %s16, 0
    %p100 = por %p98, %p99
    %p101 = scmp.ne.s32.totalorder %s89, %s90
    %p102 = scmp.eq.s32.totalorder %s17, 1
    %p103 = por %p101, %p102
    %p105 = scmp.ne.s32.totalorder %s90, %s104
    %p106 = scmp.eq.s32.totalorder %s17, 0
    %p107 = por %p105, %p106
    %s109 = sadd.s32 %s108, 1
    %p112 = scmp.eq.s32.totalorder %s11, 1
    %p113 = scmp.ne.s32.totalorder %s108, %s110
    %p114 = scmp.eq.s32.totalorder %s11, 0
    %p115 = por %p113, %p114
    %p116 = scmp.ne.s32.totalorder %s108, %s110
    %p117 = scmp.eq.s32.totalorder %s16, 1
    %p118 = por %p116, %p117
    %p119 = scmp.ne.s32.totalorder %s110, %s111
    %p120 = scmp.eq.s32.totalorder %s16, 0
    %p121 = por %p119, %p120
    %p122 = scmp.ne.s32.totalorder %s110, %s111
    %p123 = scmp.eq.s32.totalorder %s17, 1
    %p124 = por %p122, %p123
    %p126 = scmp.ne.s32.totalorder %s111, %s125
    %p127 = scmp.eq.s32.totalorder %s17, 0
    %p128 = por %p126, %p127
    %s129 = ssub.s32 %s11, %s18
    %p130 = scmp.eq.s32.totalorder %s129, 0
    %s132 = sadd.s32 %s131, 1
    %s133 = scalar_select %p130, %s131, %s132
    %p136 = pneg %p130
    %p137 = scmp.eq.s32.totalorder %s11, 1
    %p138 = por %p136, %p137
    %p139 = scmp.ne.s32.totalorder %s131, %s134
    %p140 = scmp.eq.s32.totalorder %s11, 0
    %p141 = por %p139, %p140
    %p142 = scmp.ne.s32.totalorder %s131, %s134
    %p143 = scmp.eq.s32.totalorder %s16, 1
    %p144 = por %p142, %p143
    %p145 = scmp.ne.s32.totalorder %s134, %s135
    %p146 = scmp.eq.s32.totalorder %s16, 0
    %p147 = por %p145, %p146
    %p148 = scmp.ne.s32.totalorder %s134, %s135
    %p149 = scmp.eq.s32.totalorder %s17, 1
    %p150 = por %p148, %p149
    %p152 = scmp.ne.s32.totalorder %s135, %s151
    %p153 = scmp.eq.s32.totalorder %s17, 0
    %p154 = por %p152, %p153
    %p155 = scmp.le.s32.totalorder 1, %s11
    %p156 = scmp.lt.s32.totalorder %s11, 3
    %p157 = pnand %p155, %p156
    %p158 = pneg %p157
    // Predicated region
    $region9: #{block_forward.1} parent=5 // pred_check
      _
    $region10: #{block_forward.1} parent=5 // pred_check_branch
      %160 = sbr.rel (%p157) target = $region12
    $region11: #{block_forward.1} parent=5 // pred_region
      %s161 = ssub.s32 %s11, 1
      // Predicated region
      $region13: #{block_forward.1} parent=11 // pred_check
        %p162 = pneg %p58
      $region14: #{block_forward.1} parent=11 // pred_check_branch
        %164 = sbr.rel (%p162) target = $region16
      $region15: #{block_forward.1} parent=11 // pred_region
        _
      $region16: #{block_forward.1} parent=11 // pred_fallthru
        _
      // Predicated region
      $region17: #{block_forward.1} parent=11 // pred_check
        %p165 = pneg %p79
      $region18: #{block_forward.1} parent=11 // pred_check_branch
        %167 = sbr.rel (%p165) target = $region20
      $region19: #{block_forward.1} parent=11 // pred_region
        _
      $region20: #{block_forward.1} parent=11 // pred_fallthru
        _
      // Predicated region
      $region21: #{block_forward.1} parent=11 // pred_check
        %p168 = pneg %p100
      $region22: #{block_forward.1} parent=11 // pred_check_branch
        %170 = sbr.rel (%p168) target = $region24
      $region23: #{block_forward.1} parent=11 // pred_region
        _
      $region24: #{block_forward.1} parent=11 // pred_fallthru
        _
      // Predicated region
      $region25: #{block_forward.1} parent=11 // pred_check
        %p171 = pneg %p121
      $region26: #{block_forward.1} parent=11 // pred_check_branch
        %173 = sbr.rel (%p171) target = $region28
      $region27: #{block_forward.1} parent=11 // pred_region
        _
      $region28: #{block_forward.1} parent=11 // pred_fallthru
        _
    $region12: #{block_forward.1} parent=5 // pred_fallthru
      _
    %p174 = scmp.lt.s32.totalorder %s11, 2
    // Predicated region
    $region29: #{block_forward.1} parent=5 // pred_check
      %p175 = pneg %p174
    $region30: #{block_forward.1} parent=5 // pred_check_branch
      %177 = sbr.rel (%p175) target = $region32
    $region31: #{block_forward.1} parent=5 // pred_region
      // Predicated region
      $region33: #{block_forward.1} parent=31 // pred_check
        %p178 = pneg %p31
      $region34: #{block_forward.1} parent=31 // pred_check_branch
        %180 = sbr.rel (%p178) target = $region36
      $region35: #{block_forward.1} parent=31 // pred_region
        %p181 = scmp.lt.s32.totalorder %s11, 1
        %s182 = scalar_select %p181, %s11, 1
        %s183 = smul.addr %s182, 2
        %s184 = smul.addr %s183, 8
        %s185 = scalar_lea.vmem %s0, %s184
      $region36: #{block_forward.1} parent=31 // pred_fallthru
        _
    $region32: #{block_forward.1} parent=5 // pred_fallthru
      _
    %p186 = scmp.le.s32.totalorder 1, %s11
    %p187 = scmp.lt.s32.totalorder %s11, 3
    %p188 = pnand %p186, %p187
    %p189 = pneg %p188
    // Predicated region
    $region37: #{block_forward.1} parent=5 // pred_check
      _
    $region38: #{block_forward.1} parent=5 // pred_check_branch
      %191 = sbr.rel (%p188) target = $region40
    $region39: #{block_forward.1} parent=5 // pred_region
      %s192 = ssub.s32 %s11, 1
      %p193 = scmp.lt.s32.totalorder %s16, 1
      %s194 = scalar_select %p193, %s16, 1
      %s195 = smul.addr %s194, 2
      %s196 = smul.addr %s195, 8
      %s197 = scalar_lea.vmem %s0, %s196
      %p198 = pneg %p37
      %p199 = pneg %p34
      %p200 = pneg %p58
      %p201 = pneg %p55
      %p202 = pneg %p79
      %p203 = pneg %p76
      %p204 = pneg %p100
      %p205 = pneg %p97
      %p206 = pneg %p121
      %p207 = pneg %p118
      %p208 = pneg %p147
      %p209 = pneg %p144
      %p210 = scmp.lt.s32.totalorder %s16, 1
      %s211 = scalar_select %p210, %s16, 1
      %s212 = smul.addr %s211, 2
      %s213 = smul.addr %s212, 8
      %s214 = scalar_lea.vmem %s5, %s213
      %p215 = scmp.lt.s32.totalorder %s16, 1
      %s216 = scalar_select %p215, %s16, 1
      %s217 = smul.addr %s216, 2
      %s218 = smul.addr %s217, 8
      %s219 = scalar_lea.vmem %s0, %s218
      %p220 = scmp.lt.s32.totalorder %s16, 1
      %s221 = scalar_select %p220, %s16, 1
      %s222 = smul.addr %s221, 2
      %s223 = smul.addr %s222, 8
      %s224 = scalar_lea.vmem %s5, %s223
      %vm225 = vcmask 516096
      %226 = vst.msk [vmem:[#allocation2] sm:$0x1] %vm225, 0.0
      %227 = vst.msk [vmem:[#allocation2 + $0x11] sm:$0x1] %vm225, 0.0
      %v228 = vld [vmem:[%s219] sm:$0xff]
      %v229 = vld [vmem:[%s219 + $0x8] sm:$0xff]
      %vm230 = vcmask 523264
      %231 = vst.msk [vmem:[#allocation2 + $0x1] sm:$0xff] %vm230, %v228
      %232 = vst.msk [vmem:[#allocation2 + $0x9] sm:$0xff] %vm230, %v229
      %v233 = vld [vmem:[#allocation2] sm:$0xff]
      %v234 = vld [vmem:[#allocation2 + $0x8] sm:$0xff]
      %v235 = vld [vmem:[%s1] sm:$0xff]
      %v236 = vld [vmem:[%s1 + $0x8] sm:$0xff]
      %v237 = vld [vmem:[%s1 + $0x10] sm:$0xff]
      %v238 = vld [vmem:[%s1 + $0x18] sm:$0xff]
      %v239 = vld [vmem:[%s1 + $0x20] sm:$0xff]
      %v240 = vld [vmem:[%s1 + $0x28] sm:$0xff]
      %v241 = vld [vmem:[%s1 + $0x30] sm:$0xff]
      %v242 = vld [vmem:[%s1 + $0x38] sm:$0xff]
      %v243 = vld [vmem:[#allocation2 + $0x1] sm:$0xff]
      %v244 = vld [vmem:[#allocation2 + $0x9] sm:$0xff]
      %s245 = scalar_lea.vmem %s1, 64
      %v246 = vld [vmem:[%s245] sm:$0xff]
      %v247 = vld [vmem:[%s245 + $0x8] sm:$0xff]
      %v248 = vld [vmem:[%s245 + $0x10] sm:$0xff]
      %v249 = vld [vmem:[%s245 + $0x18] sm:$0xff]
      %v250 = vld [vmem:[%s245 + $0x20] sm:$0xff]
      %v251 = vld [vmem:[%s245 + $0x28] sm:$0xff]
      %v252 = vld [vmem:[%s245 + $0x30] sm:$0xff]
      %v253 = vld [vmem:[%s245 + $0x38] sm:$0xff]
      %v255 = vsel %vm230, %v243, 0
      %v258 = vsel %vm230, %v244, 0
      %260 = vmatpush.msra.mxu0 0.0
      %261 = vmatpush.msra.mxu0 0.0
      %262 = vmatpush.msra.mxu0 0.0
      %263 = vmatpush.msra.mxu0 0.0
      %264 = vmatpush.msra.mxu0 0.0
      %265 = vmatpush.msra.mxu0 0.0
      %266 = vmatpush.msra.mxu0 0.0
      %267 = vmatpush.msra.mxu0 0.0
      %268 = vmatpush.msra.mxu0 %v253
      %269 = vmatpush.msra.mxu0 %v252
      %270 = vmatpush.msra.mxu0 %v251
      %271 = vmatpush.msra.mxu0 %v250
      %272 = vmatpush.msra.mxu0 %v249
      %273 = vmatpush.msra.mxu0 %v248
      %274 = vmatpush.msra.mxu0 %v247
      %275 = vmatpush.msra.mxu0 %v246
      %276 = vmatmul.f32.gmra.mxu0 %v255
      %v277 = vpop.f32.mrf.mxu0
      %v278 = vadd.f32 0.0, %v277
      %279 = vmatmul.f32.gmra.mxu0 %v258
      %v280 = vpop.f32.mrf.mxu0
      %v281 = vadd.f32 0.0, %v280
      %282 = vdwg.mxu0
      %v284 = vsel %vm230, %v233, 0
      %v287 = vsel %vm230, %v234, 0
      %289 = vmatpush.msra.mxu0 0.0
      %290 = vmatpush.msra.mxu0 0.0
      %291 = vmatpush.msra.mxu0 0.0
      %292 = vmatpush.msra.mxu0 0.0
      %293 = vmatpush.msra.mxu0 0.0
      %294 = vmatpush.msra.mxu0 0.0
      %295 = vmatpush.msra.mxu0 0.0
      %296 = vmatpush.msra.mxu0 0.0
      %297 = vmatpush.msra.mxu0 %v242
      %298 = vmatpush.msra.mxu0 %v241
      %299 = vmatpush.msra.mxu0 %v240
      %300 = vmatpush.msra.mxu0 %v239
      %301 = vmatpush.msra.mxu0 %v238
      %302 = vmatpush.msra.mxu0 %v237
      %303 = vmatpush.msra.mxu0 %v236
      %304 = vmatpush.msra.mxu0 %v235
      %305 = vmatmul.f32.gmra.mxu0 %v284
      %v306 = vpop.f32.mrf.mxu0
      %v307 = vadd.f32 %v278, %v306
      %308 = vmatmul.f32.gmra.mxu0 %v287
      %v309 = vpop.f32.mrf.mxu0
      %v310 = vadd.f32 %v281, %v309
      %311 = vdwg.mxu0
      %v312 = vld [vmem:[#allocation2 + $0x2] sm:$0xff]
      %v313 = vld [vmem:[#allocation2 + $0xa] sm:$0xff]
      %s314 = scalar_lea.vmem %s1, 128
      %v315 = vld [vmem:[%s314] sm:$0xff]
      %v316 = vld [vmem:[%s314 + $0x8] sm:$0xff]
      %v317 = vld [vmem:[%s314 + $0x10] sm:$0xff]
      %v318 = vld [vmem:[%s314 + $0x18] sm:$0xff]
      %v319 = vld [vmem:[%s314 + $0x20] sm:$0xff]
      %v320 = vld [vmem:[%s314 + $0x28] sm:$0xff]
      %v321 = vld [vmem:[%s314 + $0x30] sm:$0xff]
      %v322 = vld [vmem:[%s314 + $0x38] sm:$0xff]
      %v324 = vsel %vm230, %v312, 0
      %v327 = vsel %vm230, %v313, 0
      %329 = vmatpush.msra.mxu0 0.0
      %330 = vmatpush.msra.mxu0 0.0
      %331 = vmatpush.msra.mxu0 0.0
      %332 = vmatpush.msra.mxu0 0.0
      %333 = vmatpush.msra.mxu0 0.0
      %334 = vmatpush.msra.mxu0 0.0
      %335 = vmatpush.msra.mxu0 0.0
      %336 = vmatpush.msra.mxu0 0.0
      %337 = vmatpush.msra.mxu0 %v322
      %338 = vmatpush.msra.mxu0 %v321
      %339 = vmatpush.msra.mxu0 %v320
      %340 = vmatpush.msra.mxu0 %v319
      %341 = vmatpush.msra.mxu0 %v318
      %342 = vmatpush.msra.mxu0 %v317
      %343 = vmatpush.msra.mxu0 %v316
      %344 = vmatpush.msra.mxu0 %v315
      %345 = vmatmul.f32.gmra.mxu0 %v324
      %v346 = vpop.f32.mrf.mxu0
      %v347 = vadd.f32 0.0, %v346
      %348 = vmatmul.f32.gmra.mxu0 %v327
      %v349 = vpop.f32.mrf.mxu0
      %v350 = vadd.f32 0.0, %v349
      %351 = vdwg.mxu0
      %v352 = vadd.f32 %v307, %v347
      %v353 = vadd.f32 %v310, %v350
      %v354 = vmul.f32 %v352, 0.5
      %v355 = vmul.f32 %v353, 0.5
      %v356 = vmul.f32 %v352, 0.70710677
      %v357 = vmul.f32 %v353, 0.70710677
      %v358 = vmul.f32 %v356, %v356
      %v359 = vmin.f32 16.0, %v358
      %v360 = vmul.f32 %v359, 2.1237322e-06
      %v361 = vadd.f32 %v360, 0.00028619796
      %v362 = vmul.f32 %v359, %v361
      %v363 = vadd.f32 %v362, 0.0036580483
      %v364 = vmul.f32 %v359, %v363
      %v365 = vadd.f32 %v364, 0.05243302
      %v366 = vmul.f32 %v359, %v365
      %v367 = vadd.f32 %v366, 0.18741608
      %v368 = vmul.f32 %v359, %v367
      %v369 = vadd.f32 %v368, 1.1283791
      %v370 = vmul.f32 %v356, %v369
      %v371 = vmul.f32 %v359, 3.8918573e-05
      %v372 = vadd.f32 %v371, 0.001143296
      %v373 = vmul.f32 %v359, %v372
      %v374 = vadd.f32 %v373, 0.014752088
      %v375 = vmul.f32 %v359, %v374
      %v376 = vadd.f32 %v375, 0.112945676
      %v377 = vmul.f32 %v359, %v376
      %v378 = vadd.f32 %v377, 0.4994258
      %v379 = vmul.f32 %v359, %v378
      %v380 = vadd.f32 %v379, 1.0
      %v381 = vrcp.pop %v380
      %v382 = vmul.f32 %v380, %v381
      %v383 = vsub.f32 1.0, %v382
      %v384 = vmul.f32 %v381, %v383
      %v385 = vadd.f32 %v381, %v384
      %vm386 = vweird.f32 %v380
      %vm387 = vweird.f32 %v381
      %vm388 = vmor %vm386, %vm387
      %v389 = vsel %vm388, %v381, %v385
      %v390 = vand.u32 2147483647, %v380
      %vm391 = vcmp.eq.f32.partialorder %v390, 8.507059e+37
      %v392 = vand.u32 %v380, 2147483648
      %v393 = vor.u32 1.1754944e-38, %v392
      %v394 = vsel %vm391, %v393, %v389
      %v395 = vmul.f32 %v370, %v394
      %v396 = vmin.f32 %v395, 1.0
      %v397 = vmax.f32 %v396, -1.0
      %v398 = vmul.f32 %v357, %v357
      %v399 = vmin.f32 16.0, %v398
      %v400 = vmul.f32 %v399, 2.1237322e-06
      %v401 = vadd.f32 %v400, 0.00028619796
      %v402 = vmul.f32 %v399, %v401
      %v403 = vadd.f32 %v402, 0.0036580483
      %v404 = vmul.f32 %v399, %v403
      %v405 = vadd.f32 %v404, 0.05243302
      %v406 = vmul.f32 %v399, %v405
      %v407 = vadd.f32 %v406, 0.18741608
      %v408 = vmul.f32 %v399, %v407
      %v409 = vadd.f32 %v408, 1.1283791
      %v410 = vmul.f32 %v357, %v409
      %v411 = vmul.f32 %v399, 3.8918573e-05
      %v412 = vadd.f32 %v411, 0.001143296
      %v413 = vmul.f32 %v399, %v412
      %v414 = vadd.f32 %v413, 0.014752088
      %v415 = vmul.f32 %v399, %v414
      %v416 = vadd.f32 %v415, 0.112945676
      %v417 = vmul.f32 %v399, %v416
      %v418 = vadd.f32 %v417, 0.4994258
      %v419 = vmul.f32 %v399, %v418
      %v420 = vadd.f32 %v419, 1.0
      %v421 = vrcp.pop %v420
      %v422 = vmul.f32 %v420, %v421
      %v423 = vsub.f32 1.0, %v422
      %v424 = vmul.f32 %v421, %v423
      %v425 = vadd.f32 %v421, %v424
      %vm426 = vweird.f32 %v420
      %vm427 = vweird.f32 %v421
      %vm428 = vmor %vm426, %vm427
      %v429 = vsel %vm428, %v421, %v425
      %v430 = vand.u32 2147483647, %v420
      %vm431 = vcmp.eq.f32.partialorder %v430, 8.507059e+37
      %v432 = vand.u32 %v420, 2147483648
      %v433 = vor.u32 1.1754944e-38, %v432
      %v434 = vsel %vm431, %v433, %v429
      %v435 = vmul.f32 %v410, %v434
      %v436 = vmin.f32 %v435, 1.0
      %v437 = vmax.f32 %v436, -1.0
      %v438 = vadd.f32 %v397, 1.0
      %v439 = vadd.f32 %v437, 1.0
      %v440 = vmul.f32 %v354, %v438
      %v441 = vmul.f32 %v355, %v439
      %v442 = vadd.f32 %v440, %v441
      %443 = vadd.xlane.f32.xlu0 %v442
      %v444 = vpop.xlane.xlu0 %443
      %v445 = vrot.slane %v444, 4
      %v446 = vadd.f32 %v444, %v445
      %v447 = vrot.slane %v446, 2
      %v448 = vadd.f32 %v446, %v447
      %v449 = vrot.slane %v448, 1
      %v450 = vadd.f32 %v448, %v449
      %s451 = vtos %v450
      %v452 = vrcp.pop 2048.0
      %v453 = vmul.f32 2048.0, %v452
      %v454 = vsub.f32 1.0, %v453
      %v455 = vmul.f32 %v452, %v454
      %v456 = vadd.f32 %v452, %v455
      %vm457 = vweird.f32 %v452
      %v458 = vsel %vm457, %v452, %v456
      %s459 = vtos %v458
      %s460 = smul.f32 %s451, %s459
      %v461 = vstv %s460
      %v462 = vsub.f32 %v440, %v461
      %v463 = vsub.f32 %v441, %v461
      %v464 = vmul.f32 %v462, %v462
      %v465 = vmul.f32 %v463, %v463
      %v466 = vadd.f32 %v464, %v465
      %467 = vadd.xlane.f32.xlu0 %v466
      %v468 = vpop.xlane.xlu0 %467
      %v469 = vrot.slane %v468, 4
      %v470 = vadd.f32 %v468, %v469
      %v471 = vrot.slane %v470, 2
      %v472 = vadd.f32 %v470, %v471
      %v473 = vrot.slane %v472, 1
      %v474 = vadd.f32 %v472, %v473
      %s475 = vtos %v474
      %v476 = vrcp.pop 2048.0
      %v477 = vmul.f32 2048.0, %v476
      %v478 = vsub.f32 1.0, %v477
      %v479 = vmul.f32 %v476, %v478
      %v480 = vadd.f32 %v476, %v479
      %vm481 = vweird.f32 %v476
      %v482 = vsel %vm481, %v476, %v480
      %s483 = vtos %v482
      %s484 = smul.f32 %s475, %s483
      %s485 = sadd.f32 %s484, 1e-05
      %v486 = vstv %s485
      %v487 = vrsqrt.pop %v486
      %v488 = vmul.f32 %v487, %v486
      %v489 = vmul.f32 %v488, %v487
      %v490 = vmul.f32 0.5, %v489
      %v491 = vsub.f32 1.5, %v490
      %v492 = vmul.f32 %v487, %v491
      %vm493 = vweird.f32 %v486
      %vm494 = vweird.f32 %v487
      %vm495 = vmor %vm493, %vm494
      %v496 = vsel %vm495, %v487, %v492
      %s497 = vtos %v496
      %v498 = vld [vmem:[%s3] sm:$0x1]
      %v499 = vstv %s497
      %v500 = vmul.f32 %v499, %v498
      %v501 = vld [vmem:[%s3 + $0x1] sm:$0x1]
      %v502 = vmul.f32 %v461, %v500
      %v503 = vsub.f32 %v501, %v502
      %v504 = vperm.slane %v500, 0
      %v505 = vmul.f32 %v440, %v504
      %v506 = vmul.f32 %v441, %v504
      %v507 = vperm.slane %v503, 0
      %v508 = vadd.f32 %v505, %v507
      %v509 = vadd.f32 %v506, %v507
      %510 = vst [vmem:[#allocation3] sm:$0x1] 0.0
      %511 = vst [vmem:[#allocation3 + $0x11] sm:$0x1] 0.0
      %512 = vst [vmem:[#allocation3 + $0x1] sm:$0xff] %v508
      %513 = vst [vmem:[#allocation3 + $0x9] sm:$0xff] %v509
      %v514 = vld [vmem:[#allocation3] sm:$0xff]
      %v515 = vld [vmem:[#allocation3 + $0x8] sm:$0xff]
      %v516 = vld [vmem:[%s2] sm:$0xff]
      %v517 = vld [vmem:[%s2 + $0x8] sm:$0xff]
      %v518 = vld [vmem:[%s2 + $0x10] sm:$0xff]
      %v519 = vld [vmem:[%s2 + $0x18] sm:$0xff]
      %v520 = vld [vmem:[%s2 + $0x20] sm:$0xff]
      %v521 = vld [vmem:[%s2 + $0x28] sm:$0xff]
      %v522 = vld [vmem:[%s2 + $0x30] sm:$0xff]
      %v523 = vld [vmem:[%s2 + $0x38] sm:$0xff]
      %v524 = vld [vmem:[%s2 + $0x40] sm:$0xff]
      %v525 = vld [vmem:[%s2 + $0x48] sm:$0xff]
      %v526 = vld [vmem:[%s2 + $0x50] sm:$0xff]
      %v527 = vld [vmem:[%s2 + $0x58] sm:$0xff]
      %v528 = vld [vmem:[%s2 + $0x60] sm:$0xff]
      %v529 = vld [vmem:[%s2 + $0x68] sm:$0xff]
      %v530 = vld [vmem:[%s2 + $0x70] sm:$0xff]
      %v531 = vld [vmem:[%s2 + $0x78] sm:$0xff]
      %v532 = vld [vmem:[#allocation3 + $0x1] sm:$0xff]
      %v533 = vld [vmem:[#allocation3 + $0x9] sm:$0xff]
      %s534 = scalar_lea.vmem %s2, 128
      %v535 = vld [vmem:[%s534] sm:$0xff]
      %v536 = vld [vmem:[%s534 + $0x8] sm:$0xff]
      %v537 = vld [vmem:[%s534 + $0x10] sm:$0xff]
      %v538 = vld [vmem:[%s534 + $0x18] sm:$0xff]
      %v539 = vld [vmem:[%s534 + $0x20] sm:$0xff]
      %v540 = vld [vmem:[%s534 + $0x28] sm:$0xff]
      %v541 = vld [vmem:[%s534 + $0x30] sm:$0xff]
      %v542 = vld [vmem:[%s534 + $0x38] sm:$0xff]
      %v543 = vld [vmem:[%s534 + $0x40] sm:$0xff]
      %v544 = vld [vmem:[%s534 + $0x48] sm:$0xff]
      %v545 = vld [vmem:[%s534 + $0x50] sm:$0xff]
      %v546 = vld [vmem:[%s534 + $0x58] sm:$0xff]
      %v547 = vld [vmem:[%s534 + $0x60] sm:$0xff]
      %v548 = vld [vmem:[%s534 + $0x68] sm:$0xff]
      %v549 = vld [vmem:[%s534 + $0x70] sm:$0xff]
      %v550 = vld [vmem:[%s534 + $0x78] sm:$0xff]
      %551 = vmatpush.msra.mxu0 %v550
      %552 = vmatpush.msra.mxu0 %v549
      %553 = vmatpush.msra.mxu0 %v548
      %554 = vmatpush.msra.mxu0 %v547
      %555 = vmatpush.msra.mxu0 %v546
      %556 = vmatpush.msra.mxu0 %v545
      %557 = vmatpush.msra.mxu0 %v544
      %558 = vmatpush.msra.mxu0 %v543
      %559 = vmatpush.msra.mxu0 %v542
      %560 = vmatpush.msra.mxu0 %v541
      %561 = vmatpush.msra.mxu0 %v540
      %562 = vmatpush.msra.mxu0 %v539
      %563 = vmatpush.msra.mxu0 %v538
      %564 = vmatpush.msra.mxu0 %v537
      %565 = vmatpush.msra.mxu0 %v536
      %566 = vmatpush.msra.mxu0 %v535
      %567 = vmatmul.f32.gmra.mxu0 %v532
      %v568 = vpop.f32.mrf.mxu0
      %v569 = vadd.f32 0.0, %v568
      %570 = vmatmul.f32.gmra.mxu0 %v533
      %v571 = vpop.f32.mrf.mxu0
      %v572 = vadd.f32 0.0, %v571
      %573 = vdwg.mxu0
      %574 = vmatpush.msra.mxu0 %v531
      %575 = vmatpush.msra.mxu0 %v530
      %576 = vmatpush.msra.mxu0 %v529
      %577 = vmatpush.msra.mxu0 %v528
      %578 = vmatpush.msra.mxu0 %v527
      %579 = vmatpush.msra.mxu0 %v526
      %580 = vmatpush.msra.mxu0 %v525
      %581 = vmatpush.msra.mxu0 %v524
      %582 = vmatpush.msra.mxu0 %v523
      %583 = vmatpush.msra.mxu0 %v522
      %584 = vmatpush.msra.mxu0 %v521
      %585 = vmatpush.msra.mxu0 %v520
      %586 = vmatpush.msra.mxu0 %v519
      %587 = vmatpush.msra.mxu0 %v518
      %588 = vmatpush.msra.mxu0 %v517
      %589 = vmatpush.msra.mxu0 %v516
      %590 = vmatmul.f32.gmra.mxu0 %v514
      %v591 = vpop.f32.mrf.mxu0
      %v592 = vadd.f32 %v569, %v591
      %593 = vmatmul.f32.gmra.mxu0 %v515
      %v594 = vpop.f32.mrf.mxu0
      %v595 = vadd.f32 %v572, %v594
      %596 = vdwg.mxu0
      %v597 = vld [vmem:[#allocation3 + $0x2] sm:$0xff]
      %v598 = vld [vmem:[#allocation3 + $0xa] sm:$0xff]
      %s599 = scalar_lea.vmem %s2, 256
      %v600 = vld [vmem:[%s599] sm:$0xff]
      %v601 = vld [vmem:[%s599 + $0x8] sm:$0xff]
      %v602 = vld [vmem:[%s599 + $0x10] sm:$0xff]
      %v603 = vld [vmem:[%s599 + $0x18] sm:$0xff]
      %v604 = vld [vmem:[%s599 + $0x20] sm:$0xff]
      %v605 = vld [vmem:[%s599 + $0x28] sm:$0xff]
      %v606 = vld [vmem:[%s599 + $0x30] sm:$0xff]
      %v607 = vld [vmem:[%s599 + $0x38] sm:$0xff]
      %v608 = vld [vmem:[%s599 + $0x40] sm:$0xff]
      %v609 = vld [vmem:[%s599 + $0x48] sm:$0xff]
      %v610 = vld [vmem:[%s599 + $0x50] sm:$0xff]
      %v611 = vld [vmem:[%s599 + $0x58] sm:$0xff]
      %v612 = vld [vmem:[%s599 + $0x60] sm:$0xff]
      %v613 = vld [vmem:[%s599 + $0x68] sm:$0xff]
      %v614 = vld [vmem:[%s599 + $0x70] sm:$0xff]
      %v615 = vld [vmem:[%s599 + $0x78] sm:$0xff]
      %616 = vmatpush.msra.mxu0 %v615
      %617 = vmatpush.msra.mxu0 %v614
      %618 = vmatpush.msra.mxu0 %v613
      %619 = vmatpush.msra.mxu0 %v612
      %620 = vmatpush.msra.mxu0 %v611
      %621 = vmatpush.msra.mxu0 %v610
      %622 = vmatpush.msra.mxu0 %v609
      %623 = vmatpush.msra.mxu0 %v608
      %624 = vmatpush.msra.mxu0 %v607
      %625 = vmatpush.msra.mxu0 %v606
      %626 = vmatpush.msra.mxu0 %v605
      %627 = vmatpush.msra.mxu0 %v604
      %628 = vmatpush.msra.mxu0 %v603
      %629 = vmatpush.msra.mxu0 %v602
      %630 = vmatpush.msra.mxu0 %v601
      %631 = vmatpush.msra.mxu0 %v600
      %632 = vmatmul.f32.gmra.mxu0 %v597
      %v633 = vpop.f32.mrf.mxu0
      %v634 = vadd.f32 0.0, %v633
      %635 = vmatmul.f32.gmra.mxu0 %v598
      %v636 = vpop.f32.mrf.mxu0
      %v637 = vadd.f32 0.0, %v636
      %638 = vdwg.mxu0
      %v639 = vadd.f32 %v592, %v634
      %v640 = vadd.f32 %v595, %v637
      %v641 = vmul.f32 %v639, 0.5
      %v642 = vmul.f32 %v640, 0.5
      %v643 = vmul.f32 %v639, 0.70710677
      %v644 = vmul.f32 %v640, 0.70710677
      %v645 = vmul.f32 %v643, %v643
      %v646 = vmin.f32 16.0, %v645
      %v647 = vmul.f32 %v646, 2.1237322e-06
      %v648 = vadd.f32 %v647, 0.00028619796
      %v649 = vmul.f32 %v646, %v648
      %v650 = vadd.f32 %v649, 0.0036580483
      %v651 = vmul.f32 %v646, %v650
      %v652 = vadd.f32 %v651, 0.05243302
      %v653 = vmul.f32 %v646, %v652
      %v654 = vadd.f32 %v653, 0.18741608
      %v655 = vmul.f32 %v646, %v654
      %v656 = vadd.f32 %v655, 1.1283791
      %v657 = vmul.f32 %v643, %v656
      %v658 = vmul.f32 %v646, 3.8918573e-05
      %v659 = vadd.f32 %v658, 0.001143296
      %v660 = vmul.f32 %v646, %v659
      %v661 = vadd.f32 %v660, 0.014752088
      %v662 = vmul.f32 %v646, %v661
      %v663 = vadd.f32 %v662, 0.112945676
      %v664 = vmul.f32 %v646, %v663
      %v665 = vadd.f32 %v664, 0.4994258
      %v666 = vmul.f32 %v646, %v665
      %v667 = vadd.f32 %v666, 1.0
      %v668 = vrcp.pop %v667
      %v669 = vmul.f32 %v667, %v668
      %v670 = vsub.f32 1.0, %v669
      %v671 = vmul.f32 %v668, %v670
      %v672 = vadd.f32 %v668, %v671
      %vm673 = vweird.f32 %v667
      %vm674 = vweird.f32 %v668
      %vm675 = vmor %vm673, %vm674
      %v676 = vsel %vm675, %v668, %v672
      %v677 = vand.u32 2147483647, %v667
      %vm678 = vcmp.eq.f32.partialorder %v677, 8.507059e+37
      %v679 = vand.u32 %v667, 2147483648
      %v680 = vor.u32 1.1754944e-38, %v679
      %v681 = vsel %vm678, %v680, %v676
      %v682 = vmul.f32 %v657, %v681
      %v683 = vmin.f32 %v682, 1.0
      %v684 = vmax.f32 %v683, -1.0
      %v685 = vmul.f32 %v644, %v644
      %v686 = vmin.f32 16.0, %v685
      %v687 = vmul.f32 %v686, 2.1237322e-06
      %v688 = vadd.f32 %v687, 0.00028619796
      %v689 = vmul.f32 %v686, %v688
      %v690 = vadd.f32 %v689, 0.0036580483
      %v691 = vmul.f32 %v686, %v690
      %v692 = vadd.f32 %v691, 0.05243302
      %v693 = vmul.f32 %v686, %v692
      %v694 = vadd.f32 %v693, 0.18741608
      %v695 = vmul.f32 %v686, %v694
      %v696 = vadd.f32 %v695, 1.1283791
      %v697 = vmul.f32 %v644, %v696
      %v698 = vmul.f32 %v686, 3.8918573e-05
      %v699 = vadd.f32 %v698, 0.001143296
      %v700 = vmul.f32 %v686, %v699
      %v701 = vadd.f32 %v700, 0.014752088
      %v702 = vmul.f32 %v686, %v701
      %v703 = vadd.f32 %v702, 0.112945676
      %v704 = vmul.f32 %v686, %v703
      %v705 = vadd.f32 %v704, 0.4994258
      %v706 = vmul.f32 %v686, %v705
      %v707 = vadd.f32 %v706, 1.0
      %v708 = vrcp.pop %v707
      %v709 = vmul.f32 %v707, %v708
      %v710 = vsub.f32 1.0, %v709
      %v711 = vmul.f32 %v708, %v710
      %v712 = vadd.f32 %v708, %v711
      %vm713 = vweird.f32 %v707
      %vm714 = vweird.f32 %v708
      %vm715 = vmor %vm713, %vm714
      %v716 = vsel %vm715, %v708, %v712
      %v717 = vand.u32 2147483647, %v707
      %vm718 = vcmp.eq.f32.partialorder %v717, 8.507059e+37
      %v719 = vand.u32 %v707, 2147483648
      %v720 = vor.u32 1.1754944e-38, %v719
      %v721 = vsel %vm718, %v720, %v716
      %v722 = vmul.f32 %v697, %v721
      %v723 = vmin.f32 %v722, 1.0
      %v724 = vmax.f32 %v723, -1.0
      %v725 = vadd.f32 %v684, 1.0
      %v726 = vadd.f32 %v724, 1.0
      %v727 = vmul.f32 %v641, %v725
      %v728 = vmul.f32 %v642, %v726
      %v729 = vadd.f32 %v727, %v728
      %730 = vadd.xlane.f32.xlu0 %v729
      %v731 = vpop.xlane.xlu0 %730
      %v732 = vrot.slane %v731, 4
      %v733 = vadd.f32 %v731, %v732
      %v734 = vrot.slane %v733, 2
      %v735 = vadd.f32 %v733, %v734
      %v736 = vrot.slane %v735, 1
      %v737 = vadd.f32 %v735, %v736
      %s738 = vtos %v737
      %v739 = vrcp.pop 2048.0
      %v740 = vmul.f32 2048.0, %v739
      %v741 = vsub.f32 1.0, %v740
      %v742 = vmul.f32 %v739, %v741
      %v743 = vadd.f32 %v739, %v742
      %vm744 = vweird.f32 %v739
      %v745 = vsel %vm744, %v739, %v743
      %s746 = vtos %v745
      %s747 = smul.f32 %s738, %s746
      %v748 = vstv %s747
      %v749 = vsub.f32 %v727, %v748
      %v750 = vsub.f32 %v728, %v748
      %v751 = vmul.f32 %v749, %v749
      %v752 = vmul.f32 %v750, %v750
      %v753 = vadd.f32 %v751, %v752
      %754 = vadd.xlane.f32.xlu0 %v753
      %v755 = vpop.xlane.xlu0 %754
      %v756 = vrot.slane %v755, 4
      %v757 = vadd.f32 %v755, %v756
      %v758 = vrot.slane %v757, 2
      %v759 = vadd.f32 %v757, %v758
      %v760 = vrot.slane %v759, 1
      %v761 = vadd.f32 %v759, %v760
      %s762 = vtos %v761
      %v763 = vrcp.pop 2048.0
      %v764 = vmul.f32 2048.0, %v763
      %v765 = vsub.f32 1.0, %v764
      %v766 = vmul.f32 %v763, %v765
      %v767 = vadd.f32 %v763, %v766
      %vm768 = vweird.f32 %v763
      %v769 = vsel %vm768, %v763, %v767
      %s770 = vtos %v769
      %s771 = smul.f32 %s762, %s770
      %s772 = sadd.f32 %s771, 1e-05
      %v773 = vstv %s772
      %v774 = vrsqrt.pop %v773
      %v775 = vmul.f32 %v774, %v773
      %v776 = vmul.f32 %v775, %v774
      %v777 = vmul.f32 0.5, %v776
      %v778 = vsub.f32 1.5, %v777
      %v779 = vmul.f32 %v774, %v778
      %vm780 = vweird.f32 %v773
      %vm781 = vweird.f32 %v774
      %vm782 = vmor %vm780, %vm781
      %v783 = vsel %vm782, %v774, %v779
      %s784 = vtos %v783
      %v785 = vld [vmem:[%s4] sm:$0x1]
      %v786 = vstv %s784
      %v787 = vmul.f32 %v786, %v785
      %v788 = vld [vmem:[%s4 + $0x1] sm:$0x1]
      %v789 = vmul.f32 %v748, %v787
      %v790 = vsub.f32 %v788, %v789
      %v791 = vperm.slane %v787, 0
      %v792 = vmul.f32 %v727, %v791
      %v793 = vmul.f32 %v728, %v791
      %v794 = vperm.slane %v790, 0
      %v795 = vadd.f32 %v792, %v794
      %v796 = vadd.f32 %v793, %v794
      %797 = vst [vmem:[%s224] sm:$0xff] %v795
      %798 = vst [vmem:[%s224 + $0x8] sm:$0xff] %v796
      %p799 = scmp.lt.s32.totalorder %s16, 1
      %s800 = scalar_select %p799, %s16, 1
      %s801 = smul.addr %s800, 2
      %s802 = smul.addr %s801, 8
      %s803 = scalar_lea.vmem %s5, %s802
      // Predicated region
      $region41: #{block_forward.1} parent=39 // pred_check
        %p804 = pneg %p144
      $region42: #{block_forward.1} parent=39 // pred_check_branch
        %806 = sbr.rel (%p804) target = $region44
      $region43: #{block_forward.1} parent=39 // pred_region
        _
      $region44: #{block_forward.1} parent=39 // pred_fallthru
        _
    $region40: #{block_forward.1} parent=5 // pred_fallthru
      _
    %p807 = scmp.le.s32.totalorder 2, %s11
    // Predicated region
    $region45: #{block_forward.1} parent=5 // pred_check
      %p808 = pneg %p807
    $region46: #{block_forward.1} parent=5 // pred_check_branch
      %810 = sbr.rel (%p808) target = $region48
    $region47: #{block_forward.1} parent=5 // pred_region
      %s811 = ssub.s32 %s11, 2
      // Predicated region
      $region49: #{block_forward.1} parent=47 // pred_check
        %p812 = pneg %p150
      $region50: #{block_forward.1} parent=47 // pred_check_branch
        %814 = sbr.rel (%p812) target = $region52
      $region51: #{block_forward.1} parent=47 // pred_region
        %p815 = scmp.lt.s32.totalorder %s17, 1
        %s816 = scalar_select %p815, %s17, 1
        %s817 = smul.addr %s816, 2
        %s818 = smul.addr %s817, 8
        %s819 = scalar_lea.vmem %s5, %s818
      $region52: #{block_forward.1} parent=47 // pred_fallthru
        _
    $region48: #{block_forward.1} parent=5 // pred_fallthru
      _
  $region6: #{block_forward.1} parent=0 // loop_footer
    %s15 = sadd.s32 1, %s11
  $region7: #{block_forward.1} parent=0 // loop_footer_branch
    %10 = sbr.rel target = $region3
  $region8: #{block_forward.1} parent=0 // loop_exit
    _

</llo_original>
